<compile_context>
chip_gen: v5e
topology: v5e:2x2
jax: 0.10.0
libtpu: 0.0.40
codegen_flags: <defaults>
</compile_context>

<pallas_src>
import jax
import jax.numpy as jnp
from jax.experimental import pallas as pl
from jax.experimental.pallas import tpu as pltpu


# ----------------------------------------------------------------------------
# forward(): identity on local coords — no kernel, no HBM round-trip.
# ----------------------------------------------------------------------------
def hypersphere_forward(x):
    """forward(x) = x.  Returning the input directly keeps it free."""
    return x


# ----------------------------------------------------------------------------
# local_to_manifold kernel
# ----------------------------------------------------------------------------
def _local_to_manifold_kernel(x_ref, first_ref, last_ref):
    """Stereographic lift R^d -> S^d for a (tile_n, d) tile of rows.

    Outputs are split: first_ref is (tile_n, d) (lane-dense slab store),
    last_ref is (tile_n, 1).  No in-kernel concatenate / masked width-(d+1)
    stores.
    """
    x = x_ref[...]
    # Accumulate the squared norm in f32 regardless of input dtype.
    xf = x if x.dtype == jnp.float32 else x.astype(jnp.float32)
    norm_sq = jnp.sum(xf * xf, axis=-1, keepdims=True)          # (tile_n, 1) f32
    inv = pl.reciprocal(norm_sq + 1.0, approx=True)             # EUP vrcp slot
    # Elementwise scale stays in the input dtype (bf16 VALUs on v6e/v7x).
    first_ref[...] = ((2.0 * x) * inv.astype(x.dtype)).astype(first_ref.dtype)
    last_ref[...] = ((norm_sq - 1.0) * inv).astype(last_ref.dtype)
    # TODO(synk): on v5e, d=32 uses 25% of lanes; a (tile_n/4, 4, d) lane-packed
    # reduce would quadruple vector utilization there (mem-bound on v6e/v7x).


def hypersphere_local_to_manifold(x, *, max_tile_n=2048,
                                  vmem_budget_bytes=32 * 1024 * 1024):
    """local_to_manifold(): stereographic lift R^d -> S^d, tiled over rows."""
    N, d = x.shape
    itemsize = jnp.dtype(x.dtype).itemsize

    # Derive tile_n from a conservative VMEM budget (safe on v7x's 64 MiB):
    # double-buffered input tile + two double-buffered output tiles.
    bytes_per_row = 2 * (2 * d + 1) * itemsize
    tile_cap = max(8, (vmem_budget_bytes // max(bytes_per_row, 1)) // 8 * 8)
    tile_n = int(min(max_tile_n, tile_cap))
    # Don't tile wider than the (sublane-rounded) problem itself.
    tile_n = int(min(tile_n, pl.cdiv(N, 8) * 8))

    # Pad rows up to a multiple of tile_n instead of asserting divisibility.
    n_pad = pl.cdiv(N, tile_n) * tile_n - N
    xp = jnp.pad(x, ((0, n_pad), (0, 0))) if n_pad else x
    Np = N + n_pad
    grid = (Np // tile_n,)

    first, last = pl.pallas_call(
        _local_to_manifold_kernel,
        out_shape=(jax.ShapeDtypeStruct((Np, d), x.dtype),
                   jax.ShapeDtypeStruct((Np, 1), x.dtype)),
        grid=grid,
        in_specs=[pl.BlockSpec((tile_n, d), lambda i: (i, 0))],
        out_specs=(pl.BlockSpec((tile_n, d), lambda i: (i, 0)),
                   pl.BlockSpec((tile_n, 1), lambda i: (i, 0))),
        compiler_params=pltpu.CompilerParams(
            dimension_semantics=("parallel",)),
        cost_estimate=pl.CostEstimate(
            flops=5 * Np * d,
            transcendentals=Np,
            bytes_accessed=Np * (2 * d + 1) * itemsize),
    )(xp)

    points = jnp.concatenate((first, last), axis=-1)   # (Np, d+1), done once
    return points[:N] if n_pad else points


# ----------------------------------------------------------------------------
# Pure-JAX references for verification.
# ----------------------------------------------------------------------------
def _local_to_manifold_ref(x):
    norm_sq = jnp.sum(x * x, axis=-1, keepdims=True)
    return jnp.concatenate(
        (2.0 * x / (norm_sq + 1.0), (norm_sq - 1.0) / (norm_sq + 1.0)), axis=-1)


# ----------------------------------------------------------------------------
# Main
# ----------------------------------------------------------------------------
if __name__ == "__main__":
    dim = 32
    N = 16

    key = jax.random.PRNGKey(0)
    x = jax.random.normal(key, (N, dim), dtype=jnp.float32)

    # forward(): identity on local coords (module semantics), no kernel launch.
    y = hypersphere_forward(x)
    jax.block_until_ready(y)
    assert y.shape == (N, dim) and y.dtype == x.dtype
    assert jnp.allclose(y, x)

    # local_to_manifold: the module's hot-path math, implemented in Pallas.
    pts = hypersphere_local_to_manifold(x)
    jax.block_until_ready(pts)
    pts_ref = _local_to_manifold_ref(x)
    assert pts.shape == (N, dim + 1)
    # approx=True reciprocal -> relaxed tolerance.
    assert jnp.allclose(pts, pts_ref, atol=2e-3, rtol=2e-3)

    # Exercise the non-divisible / padded-rows path too.
    key2 = jax.random.PRNGKey(1)
    x2 = jax.random.normal(key2, (50, dim), dtype=jnp.float32)
    pts2 = hypersphere_local_to_manifold(x2)
    jax.block_until_ready(pts2)
    assert pts2.shape == (50, dim + 1)
    assert jnp.allclose(pts2, _local_to_manifold_ref(x2), atol=2e-3, rtol=2e-3)

    print("KERNEL_OK")
</pallas_src>

<mosaic_0001>
module attributes {stable_mosaic.version = 11 : i64} {
  func.func @_local_to_manifold_kernel(%arg0: i32, %arg1: memref<16x32xf32, #tpu.memory_space<vmem>>, %arg2: memref<16x32xf32, #tpu.memory_space<vmem>>, %arg3: memref<16x1xf32, #tpu.memory_space<vmem>>) attributes {dimension_semantics = [#tpu.dimension_semantics<parallel>], iteration_bounds = array<i64: 1>, scalar_prefetch = 0 : i64, scratch_operands = 0 : i64, tpu.core_type = #tpu.core_type<tc>, window_params = [{transform_indices = @transform_0, window_bounds = array<i64: 16, 32>}, {transform_indices = @transform_1, window_bounds = array<i64: 16, 32>}, {transform_indices = @transform_2, window_bounds = array<i64: 16, 1>}]} {
    %c0 = arith.constant 0 : index
    %c0_0 = arith.constant 0 : index
    %0 = vector.load %arg1[%c0, %c0_0] : memref<16x32xf32, #tpu.memory_space<vmem>>, vector<16x32xf32>
    %1 = arith.mulf %0, %0 : vector<16x32xf32>
    %cst = arith.constant dense<0.000000e+00> : vector<16xf32>
    %2 = vector.multi_reduction <add>, %1, %cst [1] : vector<16x32xf32> to vector<16xf32>
    %3 = vector.shape_cast %2 : vector<16xf32> to vector<16x1xf32>
    %cst_1 = arith.constant 1.000000e+00 : f32
    %4 = vector.broadcast %cst_1 : f32 to vector<16x1xf32>
    %5 = arith.addf %3, %4 : vector<16x1xf32>
    %6 = tpu.reciprocal %5 {approx = true} : vector<16x1xf32> -> vector<16x1xf32>
    %cst_2 = arith.constant 2.000000e+00 : f32
    %7 = vector.broadcast %cst_2 : f32 to vector<16x32xf32>
    %8 = arith.mulf %7, %0 : vector<16x32xf32>
    %9 = vector.broadcast %6 : vector<16x1xf32> to vector<16x32xf32>
    %10 = arith.mulf %8, %9 : vector<16x32xf32>
    %c0_3 = arith.constant 0 : index
    %c0_4 = arith.constant 0 : index
    %11 = vector.load %arg2[%c0_3, %c0_4] : memref<16x32xf32, #tpu.memory_space<vmem>>, vector<16x32xf32>
    tpu.vector_store %arg2[%c0_3, %c0_4], %10 {strides = array<i32>} : memref<16x32xf32, #tpu.memory_space<vmem>>, vector<16x32xf32>,
    %cst_5 = arith.constant 1.000000e+00 : f32
    %12 = vector.broadcast %cst_5 : f32 to vector<16x1xf32>
    %13 = arith.subf %3, %12 : vector<16x1xf32>
    %14 = arith.mulf %13, %6 : vector<16x1xf32>
    %c0_6 = arith.constant 0 : index
    %c0_7 = arith.constant 0 : index
    %15 = vector.load %arg3[%c0_6, %c0_7] : memref<16x1xf32, #tpu.memory_space<vmem>>, vector<16x1xf32>
    tpu.vector_store %arg3[%c0_6, %c0_7], %14 {strides = array<i32>} : memref<16x1xf32, #tpu.memory_space<vmem>>, vector<16x1xf32>,
    return
  }
  func.func @transform_0(%arg0: i32) -> (i32, i32) {
    %c0_i32 = arith.constant 0 : i32
    %c0_i32_0 = arith.constant 0 : i32
    return %arg0, %c0_i32 : i32, i32
  }
  func.func @transform_1(%arg0: i32) -> (i32, i32) {
    %c0_i32 = arith.constant 0 : i32
    %c0_i32_0 = arith.constant 0 : i32
    return %arg0, %c0_i32 : i32, i32
  }
  func.func @transform_2(%arg0: i32) -> (i32, i32) {
    %c0_i32 = arith.constant 0 : i32
    %c0_i32_0 = arith.constant 0 : i32
    return %arg0, %c0_i32 : i32, i32
  }
}

</mosaic_0001>

<llo_original>
// kernel: tpu_custom_call.1
$region0: #{tpu_custom_call.1}
  #allocation0 [shape = 'u32[]', space=smem, size = 0x4, offset = 0x4, fixed_abs, tag = 'smem constant byte address 0x4 - core index']
  #allocation1 [shape = 'u32[72,128]{1,0:T(1,128)}', space=vmem, size = 0x9000, scoped, tag = 'internal scratch']
  %s0 = inlined_call_operand.hbm [shape: f32[16,32], index: 0, kind: input, shape index: {}]
  %s1 = inlined_call_operand.hbm [shape: f32[16,32], index: 1, kind: output, shape index: {0}]
  %s2 = inlined_call_operand.vmem [shape: f32[16,1], index: 2, kind: output, shape index: {1}]
  %3 = xla_tuple %s1, %s2
  %s4 = sld [smem:[#allocation0]]
  $region26: #{tpu_custom_call.1} parent=0
    _
  %s6 = ssub.s32 1, %s4
  %s7 = scalar_select 0, %s6, %s4
  $region1: #{tpu_custom_call.1} parent=0
    #allocation2 [shape = 'u8[8192]{0}', space=vmem, size = 0x2000, scoped, tag = 'input window, operand 0, single buffered']
    #allocation3 [shape = 's32[1]{0}', space=sflag, size = 0x4, scoped, tag = 'scoped memory for tpu_custom_call.1']
    #allocation4 [shape = 's32[1]{0}', space=sflag, size = 0x4, scoped, tag = 'scoped memory for tpu_custom_call.1']
    #allocation5 [shape = 'u8[8192]{0}', space=vmem, size = 0x2000, scoped, tag = 'output window, operand 0, single buffered']
    %8 = vsyncpa [#allocation3], 0
    %9 = vsyncpa [#allocation4], 0
    // Predicated region
    $region2: #{tpu_custom_call.1} parent=1 // pred_check
      _
    $region3: #{tpu_custom_call.1} parent=1 // pred_check_branch
      %11 = sbr.rel (0) target = $region5
    $region4: #{tpu_custom_call.1} parent=1 // pred_region
      %13 = vsyncadd [#allocation3], 0
      %s14 = sshll.u32 %s0, 4
      %s15 = int_to_ptr.hbm [resolvable:$true] %s14
      %s16 = sshll.u32 [#allocation2], 4
      %s17 = int_to_ptr.vmem [resolvable:$true] %s16
      %22 = dma.hbm_to_vmem [thread:$0]  %s15, 256, %s17, [#allocation3], 128, 128, 8
    $region5: #{tpu_custom_call.1} parent=1 // pred_fallthru
      _
    // Predicated region
    $region6: #{tpu_custom_call.1} parent=1 // pred_check
      _
    $region7: #{tpu_custom_call.1} parent=1 // pred_check_branch
      %24 = sbr.rel (0) target = $region9
    $region8: #{tpu_custom_call.1} parent=1 // pred_region
      %26 = dma.done [#allocation3], 256
    $region9: #{tpu_custom_call.1} parent=1 // pred_fallthru
      _
    %v27 = vld [vmem:[#allocation2] sm:$0xff]
    %v28 = vld [vmem:[#allocation2 + $0x8] sm:$0xff]
    %v29 = vmul.f32 %v27, %v27
    %v30 = vmul.f32 %v28, %v28
    %vm31 = vcmask 261120
    %v32 = vsel %vm31, %v29, 0.0
    %33 = vadd.xlane.f32.xlu0 %v32
    %v34 = vpop.xlane.xlu0 %33
    %v35 = vsel %vm31, %v30, 0.0
    %36 = vadd.xlane.f32.xlu0 %v35
    %v37 = vpop.xlane.xlu0 %36
    %v38 = vadd.f32 %v34, 1.0
    %v39 = vadd.f32 %v37, 1.0
    %v40 = vrcp.pop %v38
    %v41 = vrcp.pop %v39
    %v42 = vmul.f32 %v27, 2.0
    %v43 = vmul.f32 %v28, 2.0
    %v44 = vmul.f32 %v42, %v40
    %v45 = vmul.f32 %v43, %v41
    %46 = vst.msk [vmem:[#allocation5] sm:$0xff] %vm31, %v44
    %47 = vst.msk [vmem:[#allocation5 + $0x8] sm:$0xff] %vm31, %v45
    %v48 = vsub.f32 %v34, 1.0
    %v49 = vsub.f32 %v37, 1.0
    %v50 = vmul.f32 %v48, %v40
    %v51 = vmul.f32 %v49, %v41
    %vm52 = vcmask 7168
    %53 = vst.msk [vmem:[%s2] sm:$0xff] %vm52, %v50
    %54 = vst.msk [vmem:[%s2 + $0x8] sm:$0xff] %vm52, %v51
    // Predicated region
    $region10: #{tpu_custom_call.1} parent=1 // pred_check
      _
    $region11: #{tpu_custom_call.1} parent=1 // pred_check_branch
      %56 = sbr.rel (0) target = $region13
    $region12: #{tpu_custom_call.1} parent=1 // pred_region
      %58 = vsyncadd [#allocation4], 0
      %s59 = sshll.u32 [#allocation5], 4
      %s60 = int_to_ptr.vmem [resolvable:$true] %s59
      %s61 = sshll.u32 %s1, 4
      %s62 = int_to_ptr.hbm [resolvable:$true] %s61
      %67 = dma.vmem_to_hbm [thread:$0]  %s60, 256, %s62, [#allocation4], 128, 128, 8
    $region13: #{tpu_custom_call.1} parent=1 // pred_fallthru
      _
    // Predicated region
    $region14: #{tpu_custom_call.1} parent=1 // pred_check
      _
    $region15: #{tpu_custom_call.1} parent=1 // pred_check_branch
      %69 = sbr.rel (0) target = $region17
    $region16: #{tpu_custom_call.1} parent=1 // pred_region
      _
    $region17: #{tpu_custom_call.1} parent=1 // pred_fallthru
      _
    // Predicated region
    $region18: #{tpu_custom_call.1} parent=1 // pred_check
      _
    $region19: #{tpu_custom_call.1} parent=1 // pred_check_branch
      %71 = sbr.rel (0) target = $region21
    $region20: #{tpu_custom_call.1} parent=1 // pred_region
      %73 = dma.done [#allocation4], 256
    $region21: #{tpu_custom_call.1} parent=1 // pred_fallthru
      _
    // Predicated region
    $region22: #{tpu_custom_call.1} parent=1 // pred_check
      _
    $region23: #{tpu_custom_call.1} parent=1 // pred_check_branch
      %75 = sbr.rel (0) target = $region25
    $region24: #{tpu_custom_call.1} parent=1 // pred_region
      _
    $region25: #{tpu_custom_call.1} parent=1 // pred_fallthru
      _
    %76 = vsyncpa [#allocation3], 1
    %77 = vsyncpa [#allocation4], 1

</llo_original>
